<compile_context>
chip_gen: v7x
topology: tpu7x:2x2x1
jax: 0.10.0
libtpu: 0.0.40
codegen_flags: <defaults>
</compile_context>

<pallas_src>
import functools
import math

import numpy as np
import jax
import jax.numpy as jnp
from jax.experimental import pallas as pl
from jax.experimental.pallas import tpu as pltpu


# ----------------------------- kernels --------------------------------------

def _fused_kernel(m_ref, b_ref, x_ref, y_ref, o_ref, *, compute_dtype, precision):
    # m_ref: (tc*2H, Cin*H)  conv weights folded with the row-upsample matrix
    # b_ref: (W, 2W)         column-upsample matrix (resident, index_map constant)
    # x_ref: (1, Cin, H, W)  input (resident across the channel grid axis)
    # y_ref / o_ref: (1, tc, 2H, 2W)
    cin, h, w = x_ref.shape[1], x_ref.shape[2], x_ref.shape[3]
    tc, h2, w2 = o_ref.shape[1], o_ref.shape[2], o_ref.shape[3]
    # (1, Cin, H, W) -> (Cin*H, W): free relayout when H % 8 == 0 (guarded in wrapper)
    x2d = x_ref[...].reshape(cin * h, w).astype(compute_dtype)
    u = jnp.dot(m_ref[...], x2d, precision=precision,
                preferred_element_type=jnp.float32)                 # (tc*2H, W)
    u = jnp.dot(u.astype(compute_dtype), b_ref[...], precision=precision,
                preferred_element_type=jnp.float32)                 # (tc*2H, 2W)
    o_ref[0] = (u.reshape(tc, h2, w2)
                + y_ref[0].astype(jnp.float32)).astype(o_ref.dtype)


def _loop_kernel(w_ref, a_ref, b_ref, x_ref, y_ref, o_ref, xs_ref, *,
                 compute_dtype, precision):
    # Fallback for very large Cin*H (fused matrix would not fit VMEM).
    # w_ref: (Cout, Cin) f32 in SMEM (whole array, scalar reads)
    # a_ref: (2H, H)  b_ref: (W, 2W)  x_ref: (1, Cin, H, W)
    # y_ref / o_ref: (1, tc, 2H, 2W)
    # xs_ref: VMEM scratch (Cin, H, W) f32 -- x staged/cast ONCE per grid step
    cin = x_ref.shape[1]
    tc = o_ref.shape[1]
    c0 = pl.program_id(1) * tc
    xs_ref[...] = x_ref[0].astype(jnp.float32)     # hoists per-channel loads/casts

    def o_body(o, carry):
        row = c0 + o
        # 1x1 conv (no bias), commuted in front of the (linear) upsample
        z = xs_ref[0] * w_ref[row, 0]
        for ci in range(1, cin):
            z = z + xs_ref[ci] * w_ref[row, ci]
        u = jnp.dot(a_ref[...], z.astype(compute_dtype), precision=precision,
                    preferred_element_type=jnp.float32)              # (2H, W)
        u = jnp.dot(u.astype(compute_dtype), b_ref[...], precision=precision,
                    preferred_element_type=jnp.float32)              # (2H, 2W)
        o_ref[0, o] = (u + y_ref[0, o].astype(jnp.float32)).astype(o_ref.dtype)
        return carry

    jax.lax.fori_loop(0, tc, o_body, 0)            # visible loop -> bounded live ranges


# ----------------------------- host-side helpers ----------------------------

def _up2_matrix(n):
    """(2n, n) bilinear x2 interpolation matrix, PyTorch align_corners=False."""
    m = np.zeros((2 * n, n), dtype=np.float32)
    for k in range(n):
        m[2 * k, max(k - 1, 0)] += 0.25
        m[2 * k, k] += 0.75
        m[2 * k + 1, k] += 0.75
        m[2 * k + 1, min(k + 1, n - 1)] += 0.25
    return m


def skip_upsample(x, y, conv_w, *, use_bf16_mxu=True, max_channel_tile=8,
                  vmem_budget_bytes=40 * 1024 * 1024, fuse=None):
    """SkipUpSample.forward: x -> bilinear x2 -> 1x1 conv (no bias) -> + y (all NCHW)."""
    if conv_w.ndim == 4:                           # accept PyTorch (Cout, Cin, 1, 1)
        conv_w = conv_w.reshape(conv_w.shape[0], conv_w.shape[1])
    N, Cin, H, W = x.shape
    Cout = conv_w.shape[0]
    H2, W2 = 2 * H, 2 * W
    assert conv_w.shape == (Cout, Cin)
    assert y.shape == (N, Cout, H2, W2)

    x_b = jnp.dtype(x.dtype).itemsize
    y_b = jnp.dtype(y.dtype).itemsize
    o_b = x_b
    c_b = 2 if use_bf16_mxu else 4                 # interpolation-constant bytes

    def vmem_est(tc, fused):
        est = 2 * Cin * H * W * x_b                       # x block (double-buffered)
        est += 2 * tc * H2 * W2 * (y_b + o_b)             # y in + out tiles (2-buffered)
        est += 2 * W * W2 * c_b                           # B
        if fused:
            est += 2 * tc * H2 * Cin * H * c_b            # fused conv (x) row-upsample block
        else:
            est += 2 * H2 * H * c_b                       # A
            est += Cin * H * W * 4                        # f32 x staging scratch
        return est

    # ---- pick path + channel tile from the VMEM budget ----
    can_fuse = (H % 8 == 0)                        # free reshape & 8-aligned sublane blocks
    if fuse is None:
        fuse = can_fuse
    if fuse and not can_fuse:
        fuse = False
    tc = None
    if fuse:
        for cand in range(min(Cout, max_channel_tile), 0, -1):
            if Cout % cand == 0 and vmem_est(cand, True) <= vmem_budget_bytes:
                tc = cand
                break
        if tc is None:
            fuse = False                           # fused matrix too big -> loop path
    if tc is None:
        for cand in range(min(Cout, max_channel_tile), 0, -1):
            if Cout % cand == 0 and vmem_est(cand, False) <= vmem_budget_bytes:
                tc = cand
                break
        if tc is None:
            # TODO(synk): for very large feature maps (esp. v7x 64 MiB VMEM) add a banded
            # spatial row-tile grid axis (1-input-row halo on A) instead of whole images.
            tc = 1

    est = vmem_est(tc, fuse)
    vmem_limit = int(min(128 * 1024 * 1024, max(32 * 1024 * 1024, int(est * 1.5))))

    # Steer the v7x megacore split to the batch axis when possible: x's index_map is
    # constant in c, so a channel split would duplicate the full x DMA on both cores.
    dims = ("parallel", "arbitrary") if N > 1 else ("arbitrary", "parallel")
    grid = (N, Cout // tc)

    cdt = jnp.bfloat16 if use_bf16_mxu else jnp.float32
    prec = None if use_bf16_mxu else jax.lax.Precision.HIGHEST
    B = jnp.asarray(_up2_matrix(W).T).astype(cdt)           # (W, 2W); 0.25/0.75 exact in bf16
    out_shape = jax.ShapeDtypeStruct((N, Cout, H2, W2), x.dtype)
    params = pltpu.CompilerParams(dimension_semantics=dims,
                                  vmem_limit_bytes=vmem_limit)

    if fuse:
        # M[o*2H + r, ci*H + h] = w[o, ci] * A[r, h]  (conv folded into row upsample)
        A = jnp.asarray(_up2_matrix(H))                      # (2H, H)
        M = jnp.einsum('oc,rh->orch', conv_w.astype(jnp.float32), A)
        M = M.reshape(Cout * H2, Cin * H).astype(cdt)
        kernel = functools.partial(_fused_kernel, compute_dtype=cdt, precision=prec)
        return pl.pallas_call(
            kernel,
            out_shape=out_shape,
            grid=grid,
            in_specs=[
                pl.BlockSpec((tc * H2, Cin * H), lambda n, c: (c, 0)),     # conv (x) row-up
                pl.BlockSpec((W, W2), lambda n, c: (0, 0)),                # col-up (resident)
                pl.BlockSpec((1, Cin, H, W), lambda n, c: (n, 0, 0, 0)),   # x (resident per n)
                pl.BlockSpec((1, tc, H2, W2), lambda n, c: (n, c, 0, 0)),  # skip y
            ],
            out_specs=pl.BlockSpec((1, tc, H2, W2), lambda n, c: (n, c, 0, 0)),
            compiler_params=params,
        )(M, B, x, y)

    # fallback: per-output-channel loop kernel (SMEM weights + staged x + fori loop)
    A = jnp.asarray(_up2_matrix(H)).astype(cdt)              # (2H, H)
    w2d = conv_w.astype(jnp.float32)                         # (Cout, Cin) -> SMEM scalars
    kernel = functools.partial(_loop_kernel, compute_dtype=cdt, precision=prec)
    return pl.pallas_call(
        kernel,
        out_shape=out_shape,
        grid=grid,
        in_specs=[
            pl.BlockSpec(memory_space=pltpu.MemorySpace.SMEM),         # conv weights
            pl.BlockSpec((H2, H), lambda n, c: (0, 0)),                # row-upsample A
            pl.BlockSpec((W, W2), lambda n, c: (0, 0)),                # col-upsample B
            pl.BlockSpec((1, Cin, H, W), lambda n, c: (n, 0, 0, 0)),   # x
            pl.BlockSpec((1, tc, H2, W2), lambda n, c: (n, c, 0, 0)),  # skip y
        ],
        out_specs=pl.BlockSpec((1, tc, H2, W2), lambda n, c: (n, c, 0, 0)),
        scratch_shapes=[pltpu.VMEM((Cin, H, W), jnp.float32)],
        compiler_params=params,
    )(w2d, A, B, x, y)


# ---- pure-JAX reference (PyTorch bilinear align_corners=False semantics) ----
def _up2_ref(a, axis):
    n = a.shape[axis]
    idx = jnp.arange(n)
    prev = jnp.take(a, jnp.maximum(idx - 1, 0), axis=axis)
    nxt = jnp.take(a, jnp.minimum(idx + 1, n - 1), axis=axis)
    even = 0.25 * prev + 0.75 * a
    odd = 0.75 * a + 0.25 * nxt
    out = jnp.stack([even, odd], axis=axis + 1)
    shape = list(a.shape)
    shape[axis] = 2 * n
    return out.reshape(shape)


def skip_upsample_reference(x, y, conv_w):
    xu = _up2_ref(_up2_ref(x, 2), 3)
    z = jnp.einsum('oc,nchw->nohw', conv_w, xu,
                   precision=jax.lax.Precision.HIGHEST)
    return z + y


if __name__ == "__main__":
    in_channels, s_factor = 4, 4
    Cin, Cout = in_channels + s_factor, in_channels
    N, H, W = 2, 16, 16

    key = jax.random.PRNGKey(0)
    kx, ky, kw = jax.random.split(key, 3)
    x = jax.random.normal(kx, (N, Cin, H, W), jnp.float32)
    y = jax.random.normal(ky, (N, Cout, 2 * H, 2 * W), jnp.float32)
    # deterministic stand-in for nn.Conv2d(Cin, Cout, 1, bias=False).weight[..., 0, 0]
    conv_w = jax.random.normal(kw, (Cout, Cin), jnp.float32) / math.sqrt(Cin)

    ref = skip_upsample_reference(x, y, conv_w)

    # 1) fused conv (x) row-upsample matmul path, bf16 MXU passes (the fast default);
    #    tolerance reflects bf16 operand rounding vs. the f32 reference (f32 accumulate).
    out = jax.block_until_ready(jax.jit(skip_upsample)(x, y, conv_w))
    np.testing.assert_allclose(np.asarray(out), np.asarray(ref), rtol=2e-2, atol=2e-2)

    # 2) fallback per-output-channel path with full-f32 (HIGHEST) matmuls: tight tolerance.
    f = jax.jit(functools.partial(skip_upsample, use_bf16_mxu=False, fuse=False))
    out2 = jax.block_until_ready(f(x, y, conv_w))
    np.testing.assert_allclose(np.asarray(out2), np.asarray(ref), rtol=5e-3, atol=5e-3)

    print("KERNEL_OK")
</pallas_src>

<mosaic_0001>
module attributes {stable_mosaic.version = 11 : i64} {
  func.func @_fused_kernel(%arg0: i32, %arg1: i32, %arg2: memref<128x128xbf16, #tpu.memory_space<vmem>>, %arg3: memref<16x32xbf16, #tpu.memory_space<vmem>>, %arg4: memref<1x8x16x16xf32, #tpu.memory_space<vmem>>, %arg5: memref<1x4x32x32xf32, #tpu.memory_space<vmem>>, %arg6: memref<1x4x32x32xf32, #tpu.memory_space<vmem>>) attributes {dimension_semantics = [#tpu.dimension_semantics<parallel>, #tpu.dimension_semantics<arbitrary>], iteration_bounds = array<i64: 2, 1>, scalar_prefetch = 0 : i64, scratch_operands = 0 : i64, tpu.core_type = #tpu.core_type<tc>, window_params = [{transform_indices = @transform_0, window_bounds = array<i64: 128, 128>}, {pipeline_mode = #tpu.pipeline_mode<synchronous>, transform_indices = @transform_1, window_bounds = array<i64: 16, 32>}, {transform_indices = @transform_2, window_bounds = array<i64: 1, 8, 16, 16>}, {transform_indices = @transform_3, window_bounds = array<i64: 1, 4, 32, 32>}, {transform_indices = @transform_4, window_bounds = array<i64: 1, 4, 32, 32>}]} {
    %c0 = arith.constant 0 : index
    %c0_0 = arith.constant 0 : index
    %c0_1 = arith.constant 0 : index
    %c0_2 = arith.constant 0 : index
    %0 = vector.load %arg4[%c0, %c0_0, %c0_1, %c0_2] : memref<1x8x16x16xf32, #tpu.memory_space<vmem>>, vector<1x8x16x16xf32>
    %1 = vector.shape_cast %0 : vector<1x8x16x16xf32> to vector<128x16xf32>
    %2 = arith.truncf %1 : vector<128x16xf32> to vector<128x16xbf16>
    %c0_3 = arith.constant 0 : index
    %c0_4 = arith.constant 0 : index
    %3 = vector.load %arg2[%c0_3, %c0_4] : memref<128x128xbf16, #tpu.memory_space<vmem>>, vector<128x128xbf16>
    %cst = arith.constant dense<0.000000e+00> : vector<128x16xf32>
    %4 = tpu.matmul %3, %2, %cst {dimension_numbers = #tpu.dot_dimension_numbers<[1], [0], [0], [1], [0, 0, 1, 1], [], []>} : vector<128x128xbf16>, vector<128x16xbf16>, vector<128x16xf32> -> vector<128x16xf32>
    %5 = arith.truncf %4 : vector<128x16xf32> to vector<128x16xbf16>
    %c0_5 = arith.constant 0 : index
    %c0_6 = arith.constant 0 : index
    %6 = vector.load %arg3[%c0_5, %c0_6] : memref<16x32xbf16, #tpu.memory_space<vmem>>, vector<16x32xbf16>
    %cst_7 = arith.constant dense<0.000000e+00> : vector<128x32xf32>
    %7 = tpu.matmul %5, %6, %cst_7 {dimension_numbers = #tpu.dot_dimension_numbers<[1], [0], [0], [1], [0, 0, 1, 1], [], []>} : vector<128x16xbf16>, vector<16x32xbf16>, vector<128x32xf32> -> vector<128x32xf32>
    %8 = vector.shape_cast %7 : vector<128x32xf32> to vector<4x32x32xf32>
    %c0_8 = arith.constant 0 : index
    %c0_9 = arith.constant 0 : index
    %c0_10 = arith.constant 0 : index
    %c0_11 = arith.constant 0 : index
    %9 = vector.load %arg5[%c0_8, %c0_9, %c0_10, %c0_11] : memref<1x4x32x32xf32, #tpu.memory_space<vmem>>, vector<1x4x32x32xf32>
    %10 = vector.shape_cast %9 : vector<1x4x32x32xf32> to vector<4x32x32xf32>
    %11 = arith.addf %8, %10 : vector<4x32x32xf32>
    %c0_12 = arith.constant 0 : index
    %c0_13 = arith.constant 0 : index
    %c0_14 = arith.constant 0 : index
    %c0_15 = arith.constant 0 : index
    %12 = vector.load %arg6[%c0_12, %c0_13, %c0_14, %c0_15] : memref<1x4x32x32xf32, #tpu.memory_space<vmem>>, vector<1x4x32x32xf32>
    %13 = vector.shape_cast %12 : vector<1x4x32x32xf32> to vector<4x32x32xf32>
    %14 = vector.shape_cast %11 : vector<4x32x32xf32> to vector<1x4x32x32xf32>
    tpu.vector_store %arg6[%c0_12, %c0_13, %c0_14, %c0_15], %14 {strides = array<i32>} : memref<1x4x32x32xf32, #tpu.memory_space<vmem>>, vector<1x4x32x32xf32>,
    return
  }
  func.func @transform_0(%arg0: i32, %arg1: i32) -> (i32, i32) {
    %c0_i32 = arith.constant 0 : i32
    %c0_i32_0 = arith.constant 0 : i32
    return %arg1, %c0_i32 : i32, i32
  }
  func.func @transform_1(%arg0: i32, %arg1: i32) -> (i32, i32) {
    %c0_i32 = arith.constant 0 : i32
    %c0_i32_0 = arith.constant 0 : i32
    %c0_i32_1 = arith.constant 0 : i32
    return %c0_i32, %c0_i32_0 : i32, i32
  }
  func.func @transform_2(%arg0: i32, %arg1: i32) -> (i32, i32, i32, i32) {
    %c0_i32 = arith.constant 0 : i32
    %c0_i32_0 = arith.constant 0 : i32
    %c0_i32_1 = arith.constant 0 : i32
    %c0_i32_2 = arith.constant 0 : i32
    return %arg0, %c0_i32, %c0_i32_0, %c0_i32_1 : i32, i32, i32, i32
  }
  func.func @transform_3(%arg0: i32, %arg1: i32) -> (i32, i32, i32, i32) {
    %c0_i32 = arith.constant 0 : i32
    %c0_i32_0 = arith.constant 0 : i32
    %c0_i32_1 = arith.constant 0 : i32
    return %arg0, %arg1, %c0_i32, %c0_i32_0 : i32, i32, i32, i32
  }
  func.func @transform_4(%arg0: i32, %arg1: i32) -> (i32, i32, i32, i32) {
    %c0_i32 = arith.constant 0 : i32
    %c0_i32_0 = arith.constant 0 : i32
    %c0_i32_1 = arith.constant 0 : i32
    return %arg0, %arg1, %c0_i32, %c0_i32_0 : i32, i32, i32, i32
  }
}

</mosaic_0001>

<llo_original>
// kernel: skip_upsample.1
$region0: #{skip_upsample.1}
  #allocation0 [shape = 'u32[]', space=smem, size = 0x4, offset = 0x4, fixed_abs, tag = 'smem constant byte address 0x4 - core index']
  #allocation1 [shape = 'u32[144,128]{1,0:T(1,128)}', space=vmem, size = 0x12000, scoped, tag = 'internal scratch']
  %s0 = inlined_call_operand.vmem [shape: bf16[128,128], index: 0, kind: input, shape index: {}]
  %s1 = inlined_call_operand.vmem [shape: bf16[16,32], index: 1, kind: input, shape index: {}]
  %s2 = inlined_call_operand.vmem [shape: f32[2,8,16,16], index: 2, kind: input, shape index: {}]
  %s3 = inlined_call_operand.vmem [shape: f32[2,4,32,32], index: 3, kind: input, shape index: {}]
  %s4 = inlined_call_operand.hbm [shape: f32[2,4,32,32], index: 4, kind: output, shape index: {}]
  %s5 = sld [smem:[#allocation0]]
  $region49: #{skip_upsample.1} parent=0
    _
  %s7 = ssub.s32 1, %s5
  %s8 = scalar_select 0, %s7, %s5
  $region1: #{skip_upsample.1} parent=0
    #allocation2 [shape = 'u8[131072]{0}', space=vmem, size = 0x20000, scoped, tag = 'output window, operand 0']
    #allocation3 [shape = 's32[2]{0}', space=sflag, size = 0x8, scoped, tag = 'scoped memory for skip_upsample.1']
    %9 = vsyncpa [#allocation3], 0
    %s10 = scalar_lea.sflag [#allocation3], 1
    %11 = vsyncpa %s10, 0
    loop: start=0, step=1, limit=4
    $region2: #{skip_upsample.1} parent=1 // loop_pre_header
      _
    $region3: #{skip_upsample.1} parent=1 // loop_header
      %s13 = sphi 0, %s17
      %p14 = scmp.ge.s32.totalorder %s13, 4
      %s20 = sphi 0, %s32
      %s21 = sphi 0, %s28
      %s22 = sphi 0, %s20
      %s23 = sphi 0, %s21
      %s24 = sphi 0, %s22
      %s25 = sphi 0, %s23
      %s35 = sphi 0, %s37
      %s38 = sphi 0, %s35
      %s39 = sphi 0, %s38
      %s55 = sphi 0, %s39
      %s59 = sphi 0, %s59
      %s61 = sphi 0, %s59
      %s62 = sphi 0, %s61
      %s76 = sphi 0, %s62
      %s82 = sphi 0, %s84
      %s85 = sphi 0, %s82
      %s86 = sphi 0, %s85
      %s102 = sphi 0, %s86
      %s110 = sphi 0, %s112
      %s113 = sphi 0, %s110
      %s114 = sphi 0, %s113
      %s130 = sphi 0, %s114
      %s138 = sphi 0, %s140
      %s141 = sphi 0, %s138
      %s142 = sphi 0, %s141
      %s158 = sphi 0, %s142
    $region4: #{skip_upsample.1} parent=1 // loop_header_branch
      %16 = sbr.rel (%p14) target = $region8
    $region5: #{skip_upsample.1} parent=1 // loop_body
      %s18 = ssub.s32 %s13, 1
      %s19 = ssub.s32 %s13, 2
      %s26 = sadd.s32 1, %s21
      %p27 = scmp.ge.s32.totalorder %s26, 1
      %s28 = scalar_select %p27, 0, %s26
      %s29 = sadd.s32 1, %s20
      %s30 = scalar_select %p27, %s29, %s20
      %p31 = scmp.ge.s32.totalorder %s30, 2
      %s32 = scalar_select %p31, 0, %s30
      %s33 = ssub.s32 %s21, %s28
      %p34 = scmp.eq.s32.totalorder %s33, 0
      %s36 = sadd.s32 %s35, 1
      %s37 = scalar_select %p34, %s35, %s36
      %p40 = pneg %p34
      %p41 = scmp.eq.s32.totalorder %s13, 1
      %p42 = por %p40, %p41
      %p43 = scmp.ne.s32.totalorder %s35, %s38
      %p44 = scmp.eq.s32.totalorder %s13, 0
      %p45 = por %p43, %p44
      %p46 = scmp.ne.s32.totalorder %s35, %s38
      %p47 = scmp.eq.s32.totalorder %s18, 1
      %p48 = por %p46, %p47
      %p49 = scmp.ne.s32.totalorder %s38, %s39
      %p50 = scmp.eq.s32.totalorder %s18, 0
      %p51 = por %p49, %p50
      %p52 = scmp.ne.s32.totalorder %s38, %s39
      %p53 = scmp.eq.s32.totalorder %s19, 1
      %p54 = por %p52, %p53
      %p56 = scmp.ne.s32.totalorder %s39, %s55
      %p57 = scmp.eq.s32.totalorder %s19, 0
      %p58 = por %p56, %p57
      %s60 = sadd.s32 %s59, 1
      %p63 = scmp.eq.s32.totalorder %s13, 1
      %p64 = scmp.ne.s32.totalorder %s59, %s61
      %p65 = scmp.eq.s32.totalorder %s13, 0
      %p66 = por %p64, %p65
      %p67 = scmp.ne.s32.totalorder %s59, %s61
      %p68 = scmp.eq.s32.totalorder %s18, 1
      %p69 = por %p67, %p68
      %p70 = scmp.ne.s32.totalorder %s61, %s62
      %p71 = scmp.eq.s32.totalorder %s18, 0
      %p72 = por %p70, %p71
      %p73 = scmp.ne.s32.totalorder %s61, %s62
      %p74 = scmp.eq.s32.totalorder %s19, 1
      %p75 = por %p73, %p74
      %p77 = scmp.ne.s32.totalorder %s62, %s76
      %p78 = scmp.eq.s32.totalorder %s19, 0
      %p79 = por %p77, %p78
      %s80 = ssub.s32 %s20, %s32
      %p81 = scmp.eq.s32.totalorder %s80, 0
      %s83 = sadd.s32 %s82, 1
      %s84 = scalar_select %p81, %s82, %s83
      %p87 = pneg %p81
      %p88 = scmp.eq.s32.totalorder %s13, 1
      %p89 = por %p87, %p88
      %p90 = scmp.ne.s32.totalorder %s82, %s85
      %p91 = scmp.eq.s32.totalorder %s13, 0
      %p92 = por %p90, %p91
      %p93 = scmp.ne.s32.totalorder %s82, %s85
      %p94 = scmp.eq.s32.totalorder %s18, 1
      %p95 = por %p93, %p94
      %p96 = scmp.ne.s32.totalorder %s85, %s86
      %p97 = scmp.eq.s32.totalorder %s18, 0
      %p98 = por %p96, %p97
      %p99 = scmp.ne.s32.totalorder %s85, %s86
      %p100 = scmp.eq.s32.totalorder %s19, 1
      %p101 = por %p99, %p100
      %p103 = scmp.ne.s32.totalorder %s86, %s102
      %p104 = scmp.eq.s32.totalorder %s19, 0
      %p105 = por %p103, %p104
      %s106 = ssub.s32 %s20, %s32
      %s107 = ssub.s32 %s21, %s28
      %s108 = sor.u32 %s106, %s107
      %p109 = scmp.eq.s32.totalorder %s108, 0
      %s111 = sadd.s32 %s110, 1
      %s112 = scalar_select %p109, %s110, %s111
      %p115 = pneg %p109
      %p116 = scmp.eq.s32.totalorder %s13, 1
      %p117 = por %p115, %p116
      %p118 = scmp.ne.s32.totalorder %s110, %s113
      %p119 = scmp.eq.s32.totalorder %s13, 0
      %p120 = por %p118, %p119
      %p121 = scmp.ne.s32.totalorder %s110, %s113
      %p122 = scmp.eq.s32.totalorder %s18, 1
      %p123 = por %p121, %p122
      %p124 = scmp.ne.s32.totalorder %s113, %s114
      %p125 = scmp.eq.s32.totalorder %s18, 0
      %p126 = por %p124, %p125
      %p127 = scmp.ne.s32.totalorder %s113, %s114
      %p128 = scmp.eq.s32.totalorder %s19, 1
      %p129 = por %p127, %p128
      %p131 = scmp.ne.s32.totalorder %s114, %s130
      %p132 = scmp.eq.s32.totalorder %s19, 0
      %p133 = por %p131, %p132
      %s134 = ssub.s32 %s20, %s32
      %s135 = ssub.s32 %s21, %s28
      %s136 = sor.u32 %s134, %s135
      %p137 = scmp.eq.s32.totalorder %s136, 0
      %s139 = sadd.s32 %s138, 1
      %s140 = scalar_select %p137, %s138, %s139
      %p143 = pneg %p137
      %p144 = scmp.eq.s32.totalorder %s13, 1
      %p145 = por %p143, %p144
      %p146 = scmp.ne.s32.totalorder %s138, %s141
      %p147 = scmp.eq.s32.totalorder %s13, 0
      %p148 = por %p146, %p147
      %p149 = scmp.ne.s32.totalorder %s138, %s141
      %p150 = scmp.eq.s32.totalorder %s18, 1
      %p151 = por %p149, %p150
      %p152 = scmp.ne.s32.totalorder %s141, %s142
      %p153 = scmp.eq.s32.totalorder %s18, 0
      %p154 = por %p152, %p153
      %p155 = scmp.ne.s32.totalorder %s141, %s142
      %p156 = scmp.eq.s32.totalorder %s19, 1
      %p157 = por %p155, %p156
      %p159 = scmp.ne.s32.totalorder %s142, %s158
      %p160 = scmp.eq.s32.totalorder %s19, 0
      %p161 = por %p159, %p160
      %p162 = scmp.le.s32.totalorder 1, %s13
      %p163 = scmp.lt.s32.totalorder %s13, 3
      %p164 = pnand %p162, %p163
      %p165 = pneg %p164
      // Predicated region
      $region9: #{skip_upsample.1} parent=5 // pred_check
        _
      $region10: #{skip_upsample.1} parent=5 // pred_check_branch
        %167 = sbr.rel (%p164) target = $region12
      $region11: #{skip_upsample.1} parent=5 // pred_region
        %s168 = ssub.s32 %s13, 1
        // Predicated region
        $region13: #{skip_upsample.1} parent=11 // pred_check
          %p169 = pneg %p51
        $region14: #{skip_upsample.1} parent=11 // pred_check_branch
          %171 = sbr.rel (%p169) target = $region16
        $region15: #{skip_upsample.1} parent=11 // pred_region
          %s172 = smul.u32 16, %s23
          %p173 = scmp.lt.s32.totalorder %s172, 15
          %s174 = scalar_select %p173, %s172, 15
          %s175 = smul.addr %s174, 4
          %s176 = scalar_lea.vmem %s0, %s175
          %s177 = smul.u32 16, %s23
        $region16: #{skip_upsample.1} parent=11 // pred_fallthru
          _
        // Predicated region
        $region17: #{skip_upsample.1} parent=11 // pred_check
          %p178 = pneg %p72
        $region18: #{skip_upsample.1} parent=11 // pred_check_branch
          %180 = sbr.rel (%p178) target = $region20
        $region19: #{skip_upsample.1} parent=11 // pred_region
          _
        $region20: #{skip_upsample.1} parent=11 // pred_fallthru
          _
      $region12: #{skip_upsample.1} parent=5 // pred_fallthru
        _
      %p181 = scmp.lt.s32.totalorder %s13, 2
      // Predicated region
      $region21: #{skip_upsample.1} parent=5 // pred_check
        %p182 = pneg %p181
      $region22: #{skip_upsample.1} parent=5 // pred_check_branch
        %184 = sbr.rel (%p182) target = $region24
      $region23: #{skip_upsample.1} parent=5 // pred_region
        // Predicated region
        $region25: #{skip_upsample.1} parent=23 // pred_check
          %p185 = pneg %p92
        $region26: #{skip_upsample.1} parent=23 // pred_check_branch
          %187 = sbr.rel (%p185) target = $region28
        $region27: #{skip_upsample.1} parent=23 // pred_region
          %p188 = scmp.lt.s32.totalorder %s20, 1
          %s189 = scalar_select %p188, %s20, 1
          %s190 = smul.addr %s189, 16
          %s191 = smul.addr %s190, 8
          %s192 = scalar_lea.vmem %s2, %s191
        $region28: #{skip_upsample.1} parent=23 // pred_fallthru
          _
        // Predicated region
        $region29: #{skip_upsample.1} parent=23 // pred_check
          %p193 = pneg %p120
        $region30: #{skip_upsample.1} parent=23 // pred_check_branch
          %195 = sbr.rel (%p193) target = $region32
        $region31: #{skip_upsample.1} parent=23 // pred_region
          %s196 = smul.u32 4, %s21
          %p197 = scmp.lt.s32.totalorder %s20, 1
          %s198 = scalar_select %p197, %s20, 1
          %p199 = scmp.lt.s32.totalorder %s196, 3
          %s200 = scalar_select %p199, %s196, 3
          %s201 = smul.addr %s200, 4
          %s202 = smul.addr %s198, 16
          %s203 = sadd.s32 %s201, %s202
          %s204 = smul.addr %s203, 8
          %s205 = scalar_lea.vmem %s3, %s204
          %s206 = smul.u32 4, %s21
        $region32: #{skip_upsample.1} parent=23 // pred_fallthru
          _
      $region24: #{skip_upsample.1} parent=5 // pred_fallthru
        _
      %p207 = scmp.le.s32.totalorder 1, %s13
      %p208 = scmp.lt.s32.totalorder %s13, 3
      %p209 = pnand %p207, %p208
      %p210 = pneg %p209
      // Predicated region
      $region33: #{skip_upsample.1} parent=5 // pred_check
        _
      $region34: #{skip_upsample.1} parent=5 // pred_check_branch
        %212 = sbr.rel (%p209) target = $region36
      $region35: #{skip_upsample.1} parent=5 // pred_region
        %s213 = ssub.s32 %s13, 1
        %s214 = smul.u32 16, %s23
        %p215 = scmp.lt.s32.totalorder %s214, 15
        %s216 = scalar_select %p215, %s214, 15
        %s217 = smul.addr %s216, 4
        %s218 = scalar_lea.vmem %s0, %s217
        %p219 = pneg %p51
        %p220 = pneg %p48
        %p221 = pneg %p72
        %p222 = pneg %p69
        %p223 = scmp.lt.s32.totalorder %s22, 1
        %s224 = scalar_select %p223, %s22, 1
        %s225 = smul.addr %s224, 16
        %s226 = smul.addr %s225, 8
        %s227 = scalar_lea.vmem %s2, %s226
        %p228 = pneg %p98
        %p229 = pneg %p95
        %s230 = smul.u32 4, %s23
        %p231 = scmp.lt.s32.totalorder %s22, 1
        %s232 = scalar_select %p231, %s22, 1
        %p233 = scmp.lt.s32.totalorder %s230, 3
        %s234 = scalar_select %p233, %s230, 3
        %s235 = smul.addr %s234, 4
        %s236 = smul.addr %s232, 16
        %s237 = sadd.s32 %s235, %s236
        %s238 = smul.addr %s237, 8
        %s239 = scalar_lea.vmem %s3, %s238
        %p240 = pneg %p126
        %p241 = pneg %p123
        %p242 = pneg %p154
        %p243 = pneg %p151
        %s244 = sand.u32 %s141, 1
        %s245 = scalar_lea.sflag [#allocation3], %s244
        %s246 = sand.u32 %s141, 1
        %s247 = smul.addr %s246, 128
        %s248 = scalar_lea.vmem [#allocation2], %s247
        %s249 = smul.u32 16, %s23
        %p250 = scmp.lt.s32.totalorder %s249, 15
        %s251 = scalar_select %p250, %s249, 15
        %s252 = smul.addr %s251, 4
        %s253 = scalar_lea.vmem %s0, %s252
        %s254 = smul.u32 16, %s23
        %p255 = scmp.lt.s32.totalorder %s22, 1
        %s256 = scalar_select %p255, %s22, 1
        %s257 = smul.addr %s256, 16
        %s258 = smul.addr %s257, 8
        %s259 = scalar_lea.vmem %s2, %s258
        %s260 = smul.u32 4, %s23
        %p261 = scmp.lt.s32.totalorder %s22, 1
        %s262 = scalar_select %p261, %s22, 1
        %p263 = scmp.lt.s32.totalorder %s260, 3
        %s264 = scalar_select %p263, %s260, 3
        %s265 = smul.addr %s264, 4
        %s266 = smul.addr %s262, 16
        %s267 = sadd.s32 %s265, %s266
        %s268 = smul.addr %s267, 8
        %s269 = scalar_lea.vmem %s3, %s268
        %s270 = smul.u32 4, %s23
        %s271 = smul.u32 4, %s23
        %v273 = vld [vmem:[%s259] sm:$0xff]
        %v274 = vld [vmem:[%s259 + $0x8] sm:$0xff]
        %v275 = vld [vmem:[%s259 + $0x10] sm:$0xff]
        %v276 = vld [vmem:[%s259 + $0x18] sm:$0xff]
        %v277 = vld [vmem:[%s259 + $0x20] sm:$0xff]
        %v278 = vld [vmem:[%s259 + $0x28] sm:$0xff]
        %v279 = vld [vmem:[%s259 + $0x30] sm:$0xff]
        %v280 = vld [vmem:[%s259 + $0x38] sm:$0xff]
        %v281 = vld [vmem:[%s259 + $0x40] sm:$0xff]
        %v282 = vld [vmem:[%s259 + $0x48] sm:$0xff]
        %v283 = vld [vmem:[%s259 + $0x50] sm:$0xff]
        %v284 = vld [vmem:[%s259 + $0x58] sm:$0xff]
        %v285 = vld [vmem:[%s259 + $0x60] sm:$0xff]
        %v286 = vld [vmem:[%s259 + $0x68] sm:$0xff]
        %v287 = vld [vmem:[%s259 + $0x70] sm:$0xff]
        %v288 = vld [vmem:[%s259 + $0x78] sm:$0xff]
        %v289 = vpack.c.bf16 %v274, %v273
        %v290 = vpack.c.bf16 %v276, %v275
        %v291 = vpack.c.bf16 %v278, %v277
        %v292 = vpack.c.bf16 %v280, %v279
        %v293 = vpack.c.bf16 %v282, %v281
        %v294 = vpack.c.bf16 %v284, %v283
        %v295 = vpack.c.bf16 %v286, %v285
        %v296 = vpack.c.bf16 %v288, %v287
        %v297 = vld [vmem:[%s253] sm:$0xf]
        %v298 = vld [vmem:[%s253 + $0x4] sm:$0xf]
        %v299 = vld [vmem:[%s253 + $0x8] sm:$0xf]
        %v300 = vld [vmem:[%s253 + $0xc] sm:$0xf]
        %v301 = vld [vmem:[%s253 + $0x10] sm:$0xf]
        %v302 = vld [vmem:[%s253 + $0x14] sm:$0xf]
        %v303 = vld [vmem:[%s253 + $0x18] sm:$0xf]
        %v304 = vld [vmem:[%s253 + $0x1c] sm:$0xf]
        %v305 = vld [vmem:[%s253 + $0x20] sm:$0xf]
        %v306 = vld [vmem:[%s253 + $0x24] sm:$0xf]
        %v307 = vld [vmem:[%s253 + $0x28] sm:$0xf]
        %v308 = vld [vmem:[%s253 + $0x2c] sm:$0xf]
        %v309 = vld [vmem:[%s253 + $0x30] sm:$0xf]
        %v310 = vld [vmem:[%s253 + $0x34] sm:$0xf]
        %v311 = vld [vmem:[%s253 + $0x38] sm:$0xf]
        %v312 = vld [vmem:[%s253 + $0x3c] sm:$0xf]
        %v329 = vunpack.c.l.b16 %v297
        %v330 = vunpack.c.l.b16 %v298
        %v331 = vunpack.c.l.b16 %v299
        %v332 = vunpack.c.l.b16 %v300
        %v333 = vunpack.c.l.b16 %v301
        %v334 = vunpack.c.l.b16 %v302
        %v335 = vunpack.c.l.b16 %v303
        %v336 = vunpack.c.l.b16 %v304
        %v337 = vunpack.c.l.b16 %v305
        %v338 = vunpack.c.l.b16 %v306
        %v339 = vunpack.c.l.b16 %v307
        %v340 = vunpack.c.l.b16 %v308
        %v341 = vunpack.c.l.b16 %v309
        %v342 = vunpack.c.l.b16 %v310
        %v343 = vunpack.c.l.b16 %v311
        %v344 = vunpack.c.l.b16 %v312
        %v345 = vpack.c.b16 %v330, %v329
        %v346 = vpack.c.b16 %v332, %v331
        %v347 = vpack.c.b16 %v334, %v333
        %v348 = vpack.c.b16 %v336, %v335
        %v349 = vpack.c.b16 %v338, %v337
        %v350 = vpack.c.b16 %v340, %v339
        %v351 = vpack.c.b16 %v342, %v341
        %v352 = vpack.c.b16 %v344, %v343
        %361 = vmatprep.subr.bf16.mxu0 0
        %362 = vmatpush1.bf16.msra.mxu0 %v289
        %363 = vmatprep.subr.bf16.mxu0 0
        %364 = vmatpush1.bf16.msra.mxu0 %v290
        %365 = vmatprep.subr.bf16.mxu0 0
        %366 = vmatpush1.bf16.msra.mxu0 %v291
        %367 = vmatprep.subr.bf16.mxu0 0
        %368 = vmatpush1.bf16.msra.mxu0 %v292
        %369 = vmatprep.subr.bf16.mxu0 0
        %370 = vmatpush1.bf16.msra.mxu0 %v293
        %371 = vmatprep.subr.bf16.mxu0 0
        %372 = vmatpush1.bf16.msra.mxu0 %v294
        %373 = vmatprep.subr.bf16.mxu0 0
        %374 = vmatpush1.bf16.msra.mxu0 %v295
        %375 = vmatprep.subr.bf16.mxu0 0
        %376 = vmatpush1.bf16.msra.mxu0 %v296
        %377 = vmatprep.subr.bf16.mxu0 0
        %378 = vmatpush1.bf16.msra.mxu0 0
        %379 = vmatprep.subr.bf16.mxu0 0
        %380 = vmatpush1.bf16.msra.mxu0 0
        %381 = vmatprep.subr.bf16.mxu0 0
        %382 = vmatpush1.bf16.msra.mxu0 0
        %383 = vmatprep.subr.bf16.mxu0 0
        %384 = vmatpush1.bf16.msra.mxu0 0
        %385 = vmatprep.subr.bf16.mxu0 0
        %386 = vmatpush1.bf16.msra.mxu0 0
        %387 = vmatprep.subr.bf16.mxu0 0
        %388 = vmatpush1.bf16.msra.mxu0 0
        %389 = vmatprep.subr.bf16.mxu0 0
        %390 = vmatpush1.bf16.msra.mxu0 0
        %391 = vmatprep.subr.bf16.mxu0 0
        %392 = vmatpush1.bf16.msra.mxu0 0
        %393 = vmatprep.mubr.bf16.mxu0 0
        %394 = vmatmul.mubr.bf16.gmra.mrb[0].mxu0 %v345
        %v395 = vpop.f32.mrb[0].mxu0
        %v396 = vadd.f32 0.0, %v395
        %v397 = vpop.f32.mrb[0].mxu0
        %v398 = vpop.f32.mrb[0].mxu0
        %v399 = vadd.f32 0.0, %v398
        %v400 = vpop.f32.mrb[0].mxu0
        %401 = vmatprep.mubr.bf16.mxu0 0
        %402 = vmatmul.mubr.bf16.gmra.mrb[0].mxu0 %v346
        %v403 = vpop.f32.mrb[0].mxu0
        %v404 = vadd.f32 0.0, %v403
        %v405 = vpop.f32.mrb[0].mxu0
        %v406 = vpop.f32.mrb[0].mxu0
        %v407 = vadd.f32 0.0, %v406
        %v408 = vpop.f32.mrb[0].mxu0
        %409 = vmatprep.mubr.bf16.mxu0 0
        %410 = vmatmul.mubr.bf16.gmra.mrb[0].mxu0 %v347
        %v411 = vpop.f32.mrb[0].mxu0
        %v412 = vadd.f32 0.0, %v411
        %v413 = vpop.f32.mrb[0].mxu0
        %v414 = vpop.f32.mrb[0].mxu0
        %v415 = vadd.f32 0.0, %v414
        %v416 = vpop.f32.mrb[0].mxu0
        %417 = vmatprep.mubr.bf16.mxu0 0
        %418 = vmatmul.mubr.bf16.gmra.mrb[0].mxu0 %v348
        %v419 = vpop.f32.mrb[0].mxu0
        %v420 = vadd.f32 0.0, %v419
        %v421 = vpop.f32.mrb[0].mxu0
        %v422 = vpop.f32.mrb[0].mxu0
        %v423 = vadd.f32 0.0, %v422
        %v424 = vpop.f32.mrb[0].mxu0
        %425 = vmatprep.mubr.bf16.mxu0 0
        %426 = vmatmul.mubr.bf16.gmra.mrb[0].mxu0 %v349
        %v427 = vpop.f32.mrb[0].mxu0
        %v428 = vadd.f32 0.0, %v427
        %v429 = vpop.f32.mrb[0].mxu0
        %v430 = vpop.f32.mrb[0].mxu0
        %v431 = vadd.f32 0.0, %v430
        %v432 = vpop.f32.mrb[0].mxu0
        %433 = vmatprep.mubr.bf16.mxu0 0
        %434 = vmatmul.mubr.bf16.gmra.mrb[0].mxu0 %v350
        %v435 = vpop.f32.mrb[0].mxu0
        %v436 = vadd.f32 0.0, %v435
        %v437 = vpop.f32.mrb[0].mxu0
        %v438 = vpop.f32.mrb[0].mxu0
        %v439 = vadd.f32 0.0, %v438
        %v440 = vpop.f32.mrb[0].mxu0
        %441 = vmatprep.mubr.bf16.mxu0 0
        %442 = vmatmul.mubr.bf16.gmra.mrb[0].mxu0 %v351
        %v443 = vpop.f32.mrb[0].mxu0
        %v444 = vadd.f32 0.0, %v443
        %v445 = vpop.f32.mrb[0].mxu0
        %v446 = vpop.f32.mrb[0].mxu0
        %v447 = vadd.f32 0.0, %v446
        %v448 = vpop.f32.mrb[0].mxu0
        %449 = vmatprep.mubr.bf16.mxu0 0
        %450 = vmatmul.mubr.bf16.gmra.mrb[0].mxu0 %v352
        %v451 = vpop.f32.mrb[0].mxu0
        %v452 = vadd.f32 0.0, %v451
        %v453 = vpop.f32.mrb[0].mxu0
        %v454 = vpop.f32.mrb[0].mxu0
        %v455 = vadd.f32 0.0, %v454
        %v456 = vpop.f32.mrb[0].mxu0
        %457 = vdwg.mxu0
        %v458 = vpack.c.bf16 %v399, %v396
        %v459 = vpack.c.bf16 %v407, %v404
        %v460 = vpack.c.bf16 %v415, %v412
        %v461 = vpack.c.bf16 %v423, %v420
        %v462 = vpack.c.bf16 %v431, %v428
        %v463 = vpack.c.bf16 %v439, %v436
        %v464 = vpack.c.bf16 %v447, %v444
        %v465 = vpack.c.bf16 %v455, %v452
        %v466 = vld [vmem:[%s1] sm:$0xf]
        %v467 = vld [vmem:[%s1 + $0x4] sm:$0xf]
        %v470 = vunpack.c.l.b16 %v466
        %v471 = vunpack.c.l.b16 %v467
        %v472 = vpack.c.b16 %v471, %v470
        %vm474 = vcmask 130048
        %v476 = vsel %vm474, %v458, 0
        %v479 = vsel %vm474, %v459, 0
        %v482 = vsel %vm474, %v460, 0
        %v485 = vsel %vm474, %v461, 0
        %v488 = vsel %vm474, %v462, 0
        %v491 = vsel %vm474, %v463, 0
        %v494 = vsel %vm474, %v464, 0
        %v497 = vsel %vm474, %v465, 0
        %499 = vmatprep.subr.bf16.mxu0 0
        %500 = vmatpush1.bf16.msra.mxu0 %v472
        %501 = vmatprep.subr.bf16.mxu0 0
        %502 = vmatpush1.bf16.msra.mxu0 0
        %503 = vmatprep.subr.bf16.mxu0 0
        %504 = vmatpush1.bf16.msra.mxu0 0
        %505 = vmatprep.subr.bf16.mxu0 0
        %506 = vmatpush1.bf16.msra.mxu0 0
        %507 = vmatprep.subr.bf16.mxu0 0
        %508 = vmatpush1.bf16.msra.mxu0 0
        %509 = vmatprep.subr.bf16.mxu0 0
        %510 = vmatpush1.bf16.msra.mxu0 0
        %511 = vmatprep.subr.bf16.mxu0 0
        %512 = vmatpush1.bf16.msra.mxu0 0
        %513 = vmatprep.subr.bf16.mxu0 0
        %514 = vmatpush1.bf16.msra.mxu0 0
        %515 = vmatprep.subr.bf16.mxu0 0
        %516 = vmatpush1.bf16.msra.mxu0 0
        %517 = vmatprep.subr.bf16.mxu0 0
        %518 = vmatpush1.bf16.msra.mxu0 0
        %519 = vmatprep.subr.bf16.mxu0 0
        %520 = vmatpush1.bf16.msra.mxu0 0
        %521 = vmatprep.subr.bf16.mxu0 0
        %522 = vmatpush1.bf16.msra.mxu0 0
        %523 = vmatprep.subr.bf16.mxu0 0
        %524 = vmatpush1.bf16.msra.mxu0 0
        %525 = vmatprep.subr.bf16.mxu0 0
        %526 = vmatpush1.bf16.msra.mxu0 0
        %527 = vmatprep.subr.bf16.mxu0 0
        %528 = vmatpush1.bf16.msra.mxu0 0
        %529 = vmatprep.subr.bf16.mxu0 0
        %530 = vmatpush1.bf16.msra.mxu0 0
        %531 = vmatprep.mubr.bf16.mxu0 0
        %532 = vmatmul.mubr.bf16.gmra.mrb[0].mxu0 %v476
        %v533 = vpop.f32.mrb[0].mxu0
        %v534 = vadd.f32 0.0, %v533
        %v535 = vpop.f32.mrb[0].mxu0
        %v536 = vpop.f32.mrb[0].mxu0
        %v537 = vadd.f32 0.0, %v536
        %v538 = vpop.f32.mrb[0].mxu0
        %539 = vmatprep.mubr.bf16.mxu0 0
        %540 = vmatmul.mubr.bf16.gmra.mrb[0].mxu0 %v479
        %v541 = vpop.f32.mrb[0].mxu0
        %v542 = vadd.f32 0.0, %v541
        %v543 = vpop.f32.mrb[0].mxu0
        %v544 = vpop.f32.mrb[0].mxu0
        %v545 = vadd.f32 0.0, %v544
        %v546 = vpop.f32.mrb[0].mxu0
        %547 = vmatprep.mubr.bf16.mxu0 0
        %548 = vmatmul.mubr.bf16.gmra.mrb[0].mxu0 %v482
        %v549 = vpop.f32.mrb[0].mxu0
        %v550 = vadd.f32 0.0, %v549
        %v551 = vpop.f32.mrb[0].mxu0
        %v552 = vpop.f32.mrb[0].mxu0
        %v553 = vadd.f32 0.0, %v552
        %v554 = vpop.f32.mrb[0].mxu0
        %555 = vmatprep.mubr.bf16.mxu0 0
        %556 = vmatmul.mubr.bf16.gmra.mrb[0].mxu0 %v485
        %v557 = vpop.f32.mrb[0].mxu0
        %v558 = vadd.f32 0.0, %v557
        %v559 = vpop.f32.mrb[0].mxu0
        %v560 = vpop.f32.mrb[0].mxu0
        %v561 = vadd.f32 0.0, %v560
        %v562 = vpop.f32.mrb[0].mxu0
        %563 = vmatprep.mubr.bf16.mxu0 0
        %564 = vmatmul.mubr.bf16.gmra.mrb[0].mxu0 %v488
        %v565 = vpop.f32.mrb[0].mxu0
        %v566 = vadd.f32 0.0, %v565
        %v567 = vpop.f32.mrb[0].mxu0
        %v568 = vpop.f32.mrb[0].mxu0
        %v569 = vadd.f32 0.0, %v568
        %v570 = vpop.f32.mrb[0].mxu0
        %571 = vmatprep.mubr.bf16.mxu0 0
        %572 = vmatmul.mubr.bf16.gmra.mrb[0].mxu0 %v491
        %v573 = vpop.f32.mrb[0].mxu0
        %v574 = vadd.f32 0.0, %v573
        %v575 = vpop.f32.mrb[0].mxu0
        %v576 = vpop.f32.mrb[0].mxu0
        %v577 = vadd.f32 0.0, %v576
        %v578 = vpop.f32.mrb[0].mxu0
        %579 = vmatprep.mubr.bf16.mxu0 0
        %580 = vmatmul.mubr.bf16.gmra.mrb[0].mxu0 %v494
        %v581 = vpop.f32.mrb[0].mxu0
        %v582 = vadd.f32 0.0, %v581
        %v583 = vpop.f32.mrb[0].mxu0
        %v584 = vpop.f32.mrb[0].mxu0
        %v585 = vadd.f32 0.0, %v584
        %v586 = vpop.f32.mrb[0].mxu0
        %587 = vmatprep.mubr.bf16.mxu0 0
        %588 = vmatmul.mubr.bf16.gmra.mrb[0].mxu0 %v497
        %v589 = vpop.f32.mrb[0].mxu0
        %v590 = vadd.f32 0.0, %v589
        %v591 = vpop.f32.mrb[0].mxu0
        %v592 = vpop.f32.mrb[0].mxu0
        %v593 = vadd.f32 0.0, %v592
        %v594 = vpop.f32.mrb[0].mxu0
        %595 = vdwg.mxu0
        %v596 = vld [vmem:[%s269] sm:$0xff]
        %v597 = vld [vmem:[%s269 + $0x8] sm:$0xff]
        %v598 = vld [vmem:[%s269 + $0x10] sm:$0xff]
        %v599 = vld [vmem:[%s269 + $0x18] sm:$0xff]
        %v600 = vld [vmem:[%s269 + $0x20] sm:$0xff]
        %v601 = vld [vmem:[%s269 + $0x28] sm:$0xff]
        %v602 = vld [vmem:[%s269 + $0x30] sm:$0xff]
        %v603 = vld [vmem:[%s269 + $0x38] sm:$0xff]
        %v604 = vld [vmem:[%s269 + $0x40] sm:$0xff]
        %v605 = vld [vmem:[%s269 + $0x48] sm:$0xff]
        %v606 = vld [vmem:[%s269 + $0x50] sm:$0xff]
        %v607 = vld [vmem:[%s269 + $0x58] sm:$0xff]
        %v608 = vld [vmem:[%s269 + $0x60] sm:$0xff]
        %v609 = vld [vmem:[%s269 + $0x68] sm:$0xff]
        %v610 = vld [vmem:[%s269 + $0x70] sm:$0xff]
        %v611 = vld [vmem:[%s269 + $0x78] sm:$0xff]
        %v612 = vadd.f32 %v534, %v596
        %v613 = vadd.f32 %v537, %v597
        %v614 = vadd.f32 %v542, %v598
        %v615 = vadd.f32 %v545, %v599
        %v616 = vadd.f32 %v550, %v600
        %v617 = vadd.f32 %v553, %v601
        %v618 = vadd.f32 %v558, %v602
        %v619 = vadd.f32 %v561, %v603
        %v620 = vadd.f32 %v566, %v604
        %v621 = vadd.f32 %v569, %v605
        %v622 = vadd.f32 %v574, %v606
        %v623 = vadd.f32 %v577, %v607
        %v624 = vadd.f32 %v582, %v608
        %v625 = vadd.f32 %v585, %v609
        %v626 = vadd.f32 %v590, %v610
        %v627 = vadd.f32 %v593, %v611
        %vm628 = vcmask 261120
        %629 = vst.msk [vmem:[%s248] sm:$0xff] %vm628, %v612
        %630 = vst.msk [vmem:[%s248 + $0x8] sm:$0xff] %vm628, %v613
        %631 = vst.msk [vmem:[%s248 + $0x10] sm:$0xff] %vm628, %v614
        %632 = vst.msk [vmem:[%s248 + $0x18] sm:$0xff] %vm628, %v615
        %633 = vst.msk [vmem:[%s248 + $0x20] sm:$0xff] %vm628, %v616
        %634 = vst.msk [vmem:[%s248 + $0x28] sm:$0xff] %vm628, %v617
        %635 = vst.msk [vmem:[%s248 + $0x30] sm:$0xff] %vm628, %v618
        %636 = vst.msk [vmem:[%s248 + $0x38] sm:$0xff] %vm628, %v619
        %637 = vst.msk [vmem:[%s248 + $0x40] sm:$0xff] %vm628, %v620
        %638 = vst.msk [vmem:[%s248 + $0x48] sm:$0xff] %vm628, %v621
        %639 = vst.msk [vmem:[%s248 + $0x50] sm:$0xff] %vm628, %v622
        %640 = vst.msk [vmem:[%s248 + $0x58] sm:$0xff] %vm628, %v623
        %641 = vst.msk [vmem:[%s248 + $0x60] sm:$0xff] %vm628, %v624
        %642 = vst.msk [vmem:[%s248 + $0x68] sm:$0xff] %vm628, %v625
        %643 = vst.msk [vmem:[%s248 + $0x70] sm:$0xff] %vm628, %v626
        %644 = vst.msk [vmem:[%s248 + $0x78] sm:$0xff] %vm628, %v627
        %s645 = sand.u32 %s141, 1
        %s646 = scalar_lea.sflag [#allocation3], %s645
        %s647 = sand.u32 %s141, 1
        %s648 = smul.addr %s647, 128
        %s649 = scalar_lea.vmem [#allocation2], %s648
        // Predicated region
        $region37: #{skip_upsample.1} parent=35 // pred_check
          %p650 = pneg %p151
        $region38: #{skip_upsample.1} parent=35 // pred_check_branch
          %652 = sbr.rel (%p650) target = $region40
        $region39: #{skip_upsample.1} parent=35 // pred_region
          %s653 = smul.u32 4, %s23
          %s655 = ssub.s32 2048, 2048
          %656 = vsyncadd %s646, %s655
          %s657 = smul.addr %s653, 4
          %s658 = smul.addr %s22, 16
          %s659 = sadd.s32 %s657, %s658
          %s660 = smul.addr %s659, 128
          %s661 = scalar_lea.hbm %s4, %s660
          %s662 = sshll.u32 %s649, 4
          %s663 = int_to_ptr.vmem [resolvable:$true] %s662
          %668 = dma.vmem_to_hbm [thread:$0]  %s663, 2048, %s661, %s646, 128, 128, 8
        $region40: #{skip_upsample.1} parent=35 // pred_fallthru
          _
      $region36: #{skip_upsample.1} parent=5 // pred_fallthru
        _
      %p669 = scmp.le.s32.totalorder 2, %s13
      // Predicated region
      $region41: #{skip_upsample.1} parent=5 // pred_check
        %p670 = pneg %p669
      $region42: #{skip_upsample.1} parent=5 // pred_check_branch
        %672 = sbr.rel (%p670) target = $region44
      $region43: #{skip_upsample.1} parent=5 // pred_region
        %s673 = ssub.s32 %s13, 2
        // Predicated region
        $region45: #{skip_upsample.1} parent=43 // pred_check
          %p674 = pneg %p157
        $region46: #{skip_upsample.1} parent=43 // pred_check_branch
          %676 = sbr.rel (%p674) target = $region48
        $region47: #{skip_upsample.1} parent=43 // pred_region
          %s677 = sand.u32 %s142, 1
          %s678 = scalar_lea.sflag [#allocation3], %s677
          %s679 = sand.u32 %s142, 1
          %s680 = smul.addr %s679, 128
          %s681 = scalar_lea.vmem [#allocation2], %s680
          %682 = dma.done %s678, 2048
        $region48: #{skip_upsample.1} parent=43 // pred_fallthru
          _
      $region44: #{skip_upsample.1} parent=5 // pred_fallthru
        _
    $region6: #{skip_upsample.1} parent=1 // loop_footer
      %s17 = sadd.s32 1, %s13
    $region7: #{skip_upsample.1} parent=1 // loop_footer_branch
      %12 = sbr.rel target = $region3
    $region8: #{skip_upsample.1} parent=1 // loop_exit
      _
    %683 = vsyncpa [#allocation3], 1
    %s684 = scalar_lea.sflag [#allocation3], 1
    %685 = vsyncpa %s684, 1

</llo_original>
